<compile_context>
chip_gen: v7x
topology: tpu7x:2x2x1
jax: 0.10.0
libtpu: 0.0.40
codegen_flags: <defaults>
</compile_context>

<pallas_src>
import functools

import jax
import jax.numpy as jnp
from jax import lax
from jax.experimental import pallas as pl
from jax.experimental.pallas import tpu as pltpu


def _round_up(x, m):
    return ((x + m - 1) // m) * m


# Canonical [M, K] x [K, N] contraction (contract lhs dim 1 with rhs dim 0).
_MM_DIMS = (((1,), (0,)), ((), ()))


# --------------------------------------------------------------------------- #
# Kernel                                                                      #
# --------------------------------------------------------------------------- #
def _mlp_kernel(x_ref, wgu_ref, wd_ref, o_ref, acc_ref):
    """One grid step (s: optional core split, i: row tiles, j: intermediate blocks).

    x_ref   : (tm, H)         VMEM  token rows
    wgu_ref : (1, H, 2*tn)    VMEM  fused gate/up weight block (pre-transposed)
    wd_ref  : (1, tn, H)      VMEM  down_proj weight block (pre-transposed)
    o_ref   : (1, tm, H)      VMEM  output tile (resident across j)
    acc_ref : (tm, H) f32     VMEM  accumulator scratch
    """
    j = pl.program_id(2)

    @pl.when(j == 0)
    def _():
        acc_ref[...] = jnp.zeros_like(acc_ref)

    x = x_ref[...]                                   # (tm, H)
    wgu = wgu_ref[0]                                 # (H, 2*tn); [:, :tn] = gate^T
    tn = wgu.shape[1] // 2

    # Single fused MXU matmul for gate and up, f32 accumulation.
    gu = lax.dot_general(x, wgu, _MM_DIMS,
                         preferred_element_type=jnp.float32)     # (tm, 2*tn)
    gate = gu[:, :tn]
    up = gu[:, tn:]

    # SiLU(gate) * up in f32 (VPU + EUP).
    hidden = (gate * jax.nn.sigmoid(gate)) * up                  # (tm, tn)

    # Partial down projection for this intermediate block, accumulated in f32.
    acc_ref[...] += lax.dot_general(hidden.astype(x.dtype), wd_ref[0], _MM_DIMS,
                                    preferred_element_type=jnp.float32)

    @pl.when(j == pl.num_programs(2) - 1)
    def _():
        o_ref[0] = acc_ref[...].astype(o_ref.dtype)


# --------------------------------------------------------------------------- #
# One-time weight repack (do this at model-load time, not per forward call)   #
# --------------------------------------------------------------------------- #
def prepare_qwen2_mlp_weights(w_gate, w_up, w_down, *, tn=512):
    """Repack PyTorch-layout MLP weights for the Pallas kernel.

    w_gate, w_up : [I, H]  (nn.Linear [out, in], bias=False)
    w_down       : [H, I]
    Returns:
      w_gu : [n_blocks, H, 2*tn_eff]  fused gate/up, pre-transposed
      w_d  : [n_blocks, tn_eff, H]    down_proj, pre-transposed
    I is zero-padded to n_blocks*tn_eff with n_blocks even (correctness-neutral:
    padded gate/up columns are 0 -> silu(0)*0 = 0 -> zero contribution).
    """
    I, H = w_gate.shape
    assert w_up.shape == (I, H) and w_down.shape == (H, I)

    tn_eff = min(int(tn), _round_up(I, 128))
    tn_eff = max(128, (tn_eff // 128) * 128)
    n_blocks = _round_up(pl.cdiv(I, tn_eff), 2)      # even -> 2-TC reduction split possible
    I_pad = n_blocks * tn_eff
    pad = I_pad - I

    wg = jnp.pad(w_gate, ((0, pad), (0, 0)))         # [I_pad, H]
    wu = jnp.pad(w_up, ((0, pad), (0, 0)))           # [I_pad, H]
    wd = jnp.pad(w_down, ((0, 0), (0, pad)))         # [H, I_pad]

    wg_b = wg.reshape(n_blocks, tn_eff, H)
    wu_b = wu.reshape(n_blocks, tn_eff, H)
    w_gu = jnp.transpose(jnp.concatenate([wg_b, wu_b], axis=1), (0, 2, 1))
    w_d = jnp.transpose(wd, (1, 0)).reshape(n_blocks, tn_eff, H)
    return w_gu, w_d


# --------------------------------------------------------------------------- #
# Per-generation / per-dtype tile selection                                   #
# --------------------------------------------------------------------------- #
def _device_hints():
    kind = ""
    try:
        kind = jax.devices()[0].device_kind.lower()
    except Exception:
        pass
    vmem_cap = None
    try:
        vmem_cap = int(pltpu.get_tpu_info().vmem_capacity_bytes)
    except Exception:
        vmem_cap = None
    if not vmem_cap:
        vmem_cap = (64 << 20) if "v7" in kind else (128 << 20)
    return kind, vmem_cap


def _select_tm_and_vmem(M, H, tn, w_bytes, x_bytes, kind, vmem_cap, tm_override=None):
    """Pick a row tile tm and a VMEM limit that fit the chip's VMEM budget."""
    if "v7" in kind:                # 64 MiB VMEM/TC, ~3.2 TB/s -> compute-bound by tm~384-512
        tm_target, budget = 512, min(56 << 20, vmem_cap - (8 << 20))
    elif "v6" in kind:              # 128 MiB VMEM, needs large tm to beat HBM roofline
        tm_target, budget = 768, min(96 << 20, vmem_cap - (16 << 20))
    elif "v5" in kind:              # v5e: already ~roofline-balanced at modest tm
        tm_target, budget = 384, min(80 << 20, vmem_cap - (16 << 20))
    else:
        tm_target, budget = 512, max(min(80 << 20, vmem_cap - (16 << 20)), 32 << 20)
    budget = max(budget, 24 << 20)

    def est(tm):
        w_bufs = 2 * (3 * tn) * H * w_bytes          # fused gate/up (2tn) + down (tn), double-buffered
        x_buf = 2 * tm * H * x_bytes
        o_buf = 2 * tm * H * max(x_bytes, 4)         # output may be f32 partials
        acc = tm * H * 4
        interm = 16 * tm * tn                        # gu(f32) + hidden(f32) + cast temporaries
        return w_bufs + x_buf + o_buf + acc + interm

    if tm_override is not None:
        tm = _round_up(max(8, int(tm_override)), 8)
    else:
        tm = tm_target
        while tm > 128 and est(tm) > budget:
            tm -= 64
        tm = max(tm, 128)

    # Never bigger than the (padded) token count.
    tm = min(tm, _round_up(max(M, 1), 8))
    tm = _round_up(tm, 8)

    vmem_limit = min(vmem_cap - (4 << 20), max(budget, est(tm) + (8 << 20)))
    vmem_limit = max(vmem_limit, 32 << 20)
    return tm, int(vmem_limit)


# --------------------------------------------------------------------------- #
# Forward pass (prepared weights)                                             #
# --------------------------------------------------------------------------- #
@functools.partial(jax.jit, static_argnames=("tm",))
def qwen2_mlp(x, w_gu, w_d, *, tm=None):
    """SwiGLU MLP forward with prepared weights (see prepare_qwen2_mlp_weights).

    x    : [B, S, H]
    w_gu : [n_blocks, H, 2*tn]
    w_d  : [n_blocks, tn, H]
    returns: [B, S, H] (dtype of x)
    """
    B, S, H = x.shape
    n_blocks, H2, two_tn = w_gu.shape
    tn = two_tn // 2
    assert H2 == H and two_tn == 2 * tn
    assert w_d.shape == (n_blocks, tn, H)
    M = B * S

    kind, vmem_cap = _device_hints()
    w_bytes = jnp.dtype(w_gu.dtype).itemsize
    x_bytes = jnp.dtype(x.dtype).itemsize
    tm_eff, vmem_limit = _select_tm_and_vmem(M, H, tn, w_bytes, x_bytes,
                                             kind, vmem_cap, tm_override=tm)

    M_pad = _round_up(M, tm_eff)
    x2 = x.reshape(M, H)
    if M_pad != M:
        x2 = jnp.pad(x2, ((0, M_pad - M), (0, 0)))   # padded rows give zero output
    m_tiles = M_pad // tm_eff

    # v7x decode: only one row tile -> split the reduction blocks across the two
    # TensorCores via a leading "parallel" grid axis (f32 partials, summed below).
    n_splits = 2 if ("v7" in kind and m_tiles == 1 and n_blocks % 2 == 0) else 1
    blocks_per_split = n_blocks // n_splits
    out_dtype = x.dtype if n_splits == 1 else jnp.float32

    grid = (n_splits, m_tiles, blocks_per_split)

    out = pl.pallas_call(
        _mlp_kernel,
        out_shape=jax.ShapeDtypeStruct((n_splits, M_pad, H), out_dtype),
        grid_spec=pltpu.PrefetchScalarGridSpec(
            num_scalar_prefetch=0,
            grid=grid,
            in_specs=[
                pl.BlockSpec((tm_eff, H), lambda s, i, j: (i, 0)),            # x rows
                pl.BlockSpec((1, H, 2 * tn),                                  # fused gate/up
                             lambda s, i, j: (s * blocks_per_split + j, 0, 0)),
                pl.BlockSpec((1, tn, H),                                      # down_proj
                             lambda s, i, j: (s * blocks_per_split + j, 0, 0)),
            ],
            out_specs=pl.BlockSpec((1, tm_eff, H), lambda s, i, j: (s, i, 0)),
            scratch_shapes=[pltpu.VMEM((tm_eff, H), jnp.float32)],
        ),
        compiler_params=pltpu.CompilerParams(
            dimension_semantics=("parallel", "parallel", "arbitrary"),
            vmem_limit_bytes=vmem_limit,
        ),
    )(x2, w_gu, w_d)

    if n_splits == 1:
        out = out[0]
    else:
        out = jnp.sum(out, axis=0).astype(x.dtype)
    if M_pad != M:
        out = out[:M]
    return out.reshape(B, S, H)


def qwen2_mlp_from_torch_layout(x, w_gate, w_up, w_down, *, tn=512, tm=None):
    """Convenience wrapper (testing): repacks PyTorch-layout weights per call.
    In production, call prepare_qwen2_mlp_weights once at model-load time."""
    w_gu, w_d = prepare_qwen2_mlp_weights(w_gate, w_up, w_down, tn=tn)
    return qwen2_mlp(x, w_gu, w_d, tm=tm)


# --------------------------------------------------------------------------- #
# Reference + tests                                                           #
# --------------------------------------------------------------------------- #
def _reference_mlp(x, w_gate, w_up, w_down):
    g = jnp.einsum("bsh,ih->bsi", x, w_gate)
    u = jnp.einsum("bsh,ih->bsi", x, w_up)
    h = jax.nn.silu(g) * u
    return jnp.einsum("bsi,hi->bsh", h, w_down)


if __name__ == "__main__":
    # Small, deterministic config (Qwen2 uses hidden_act="silu").
    batch, seq = 2, 8
    hidden_size = 128
    intermediate_size = 256

    key = jax.random.PRNGKey(0)
    kx, kg, ku, kd = jax.random.split(key, 4)

    x = jax.random.normal(kx, (batch, seq, hidden_size), dtype=jnp.float32)
    # nn.Linear weights are [out_features, in_features], bias=False.
    w_gate = jax.random.normal(kg, (intermediate_size, hidden_size), jnp.float32) * 0.02
    w_up = jax.random.normal(ku, (intermediate_size, hidden_size), jnp.float32) * 0.02
    w_down = jax.random.normal(kd, (hidden_size, intermediate_size), jnp.float32) * 0.02

    # --- f32 path (weights prepared once) ---
    w_gu, w_d = prepare_qwen2_mlp_weights(w_gate, w_up, w_down)
    out = qwen2_mlp(x, w_gu, w_d)
    jax.block_until_ready(out)
    ref = _reference_mlp(x, w_gate, w_up, w_down)
    assert out.shape == (batch, seq, hidden_size)
    assert jnp.allclose(out, ref, atol=2e-4, rtol=2e-4)

    # --- ragged token count (B*S not a multiple of the row tile) ---
    x_r = x[:, :5, :]
    out_r = qwen2_mlp_from_torch_layout(x_r, w_gate, w_up, w_down)
    jax.block_until_ready(out_r)
    ref_r = _reference_mlp(x_r, w_gate, w_up, w_down)
    assert out_r.shape == (batch, 5, hidden_size)
    assert jnp.allclose(out_r, ref_r, atol=2e-4, rtol=2e-4)

    # --- intermediate size NOT a multiple of 128 (exercises I padding) ---
    I2 = 192
    w_gate2, w_up2, w_down2 = w_gate[:I2], w_up[:I2], w_down[:, :I2]
    w_gu2, w_d2 = prepare_qwen2_mlp_weights(w_gate2, w_up2, w_down2)
    out2 = qwen2_mlp(x, w_gu2, w_d2)
    jax.block_until_ready(out2)
    ref2 = _reference_mlp(x, w_gate2, w_up2, w_down2)
    assert jnp.allclose(out2, ref2, atol=2e-4, rtol=2e-4)

    # --- bf16 production dtype policy, checked numerically vs f32 reference ---
    xb = x.astype(jnp.bfloat16)
    wg_b = w_gate.astype(jnp.bfloat16)
    wu_b = w_up.astype(jnp.bfloat16)
    wd_b = w_down.astype(jnp.bfloat16)
    w_gu_b, w_d_b = prepare_qwen2_mlp_weights(wg_b, wu_b, wd_b)
    out_b = qwen2_mlp(xb, w_gu_b, w_d_b)
    jax.block_until_ready(out_b)
    ref_b = _reference_mlp(xb.astype(jnp.float32), wg_b.astype(jnp.float32),
                           wu_b.astype(jnp.float32), wd_b.astype(jnp.float32))
    assert out_b.dtype == jnp.bfloat16
    assert out_b.shape == (batch, seq, hidden_size)
    assert jnp.allclose(out_b.astype(jnp.float32), ref_b, atol=1e-3, rtol=5e-2)

    print("KERNEL_OK")
</pallas_src>

<mosaic_0001>
module attributes {stable_mosaic.version = 11 : i64} {
  func.func @_mlp_kernel(%arg0: i32, %arg1: i32, %arg2: i32, %arg3: memref<16x128xf32, #tpu.memory_space<vmem>>, %arg4: memref<1x128x512xf32, #tpu.memory_space<vmem>>, %arg5: memref<1x256x128xf32, #tpu.memory_space<vmem>>, %arg6: memref<1x16x128xf32, #tpu.memory_space<vmem>>, %arg7: memref<16x128xf32, #tpu.memory_space<vmem>>) attributes {dimension_semantics = [#tpu.dimension_semantics<parallel>, #tpu.dimension_semantics<parallel>, #tpu.dimension_semantics<arbitrary>], iteration_bounds = array<i64: 1, 1, 2>, scalar_prefetch = 0 : i64, scratch_operands = 1 : i64, tpu.core_type = #tpu.core_type<tc>, window_params = [{transform_indices = @transform_0, window_bounds = array<i64: 16, 128>}, {transform_indices = @transform_1, window_bounds = array<i64: 1, 128, 512>}, {transform_indices = @transform_2, window_bounds = array<i64: 1, 256, 128>}, {transform_indices = @transform_3, window_bounds = array<i64: 1, 16, 128>}]} {
    %c0_i32 = arith.constant 0 : i32
    %0 = arith.cmpi eq, %arg2, %c0_i32 : i32
    %1 = arith.extui %0 : i1 to i32
    %c0_i32_0 = arith.constant 0 : i32
    %2 = arith.cmpi ne, %1, %c0_i32_0 : i32
    scf.if %2 {
      %cst_15 = arith.constant 0.000000e+00 : f32
      %25 = vector.broadcast %cst_15 : f32 to vector<16x128xf32>
      %c0_16 = arith.constant 0 : index
      %c0_17 = arith.constant 0 : index
      %26 = vector.load %arg7[%c0_16, %c0_17] : memref<16x128xf32, #tpu.memory_space<vmem>>, vector<16x128xf32>
      tpu.vector_store %arg7[%c0_16, %c0_17], %25 {strides = array<i32>} : memref<16x128xf32, #tpu.memory_space<vmem>>, vector<16x128xf32>,
    } else {
    }
    %c0 = arith.constant 0 : index
    %c0_1 = arith.constant 0 : index
    %3 = vector.load %arg3[%c0, %c0_1] : memref<16x128xf32, #tpu.memory_space<vmem>>, vector<16x128xf32>
    %c0_2 = arith.constant 0 : index
    %c0_3 = arith.constant 0 : index
    %c0_4 = arith.constant 0 : index
    %4 = vector.load %arg4[%c0_2, %c0_3, %c0_4] : memref<1x128x512xf32, #tpu.memory_space<vmem>>, vector<1x128x512xf32>
    %5 = vector.shape_cast %4 : vector<1x128x512xf32> to vector<128x512xf32>
    %cst = arith.constant dense<0.000000e+00> : vector<16x512xf32>
    %6 = tpu.matmul %3, %5, %cst {dimension_numbers = #tpu.dot_dimension_numbers<[1], [0], [0], [1], [0, 0, 1, 1], [], []>} : vector<16x128xf32>, vector<128x512xf32>, vector<16x512xf32> -> vector<16x512xf32>
    %7 = vector.extract_strided_slice %6 {offsets = [0, 0], sizes = [16, 256], strides = [1, 1]} : vector<16x512xf32> to vector<16x256xf32>
    %8 = vector.extract_strided_slice %6 {offsets = [0, 256], sizes = [16, 256], strides = [1, 1]} : vector<16x512xf32> to vector<16x256xf32>
    %9 = arith.negf %7 : vector<16x256xf32>
    %10 = math.exp %9 : vector<16x256xf32>
    %cst_5 = arith.constant 1.000000e+00 : f32
    %11 = vector.broadcast %cst_5 : f32 to vector<16x256xf32>
    %12 = arith.addf %11, %10 : vector<16x256xf32>
    %13 = arith.divf %11, %12 : vector<16x256xf32>
    %14 = arith.mulf %7, %13 : vector<16x256xf32>
    %15 = arith.mulf %14, %8 : vector<16x256xf32>
    %c0_6 = arith.constant 0 : index
    %c0_7 = arith.constant 0 : index
    %16 = vector.load %arg7[%c0_6, %c0_7] : memref<16x128xf32, #tpu.memory_space<vmem>>, vector<16x128xf32>
    %c0_8 = arith.constant 0 : index
    %c0_9 = arith.constant 0 : index
    %c0_10 = arith.constant 0 : index
    %17 = vector.load %arg5[%c0_8, %c0_9, %c0_10] : memref<1x256x128xf32, #tpu.memory_space<vmem>>, vector<1x256x128xf32>
    %18 = vector.shape_cast %17 : vector<1x256x128xf32> to vector<256x128xf32>
    %cst_11 = arith.constant dense<0.000000e+00> : vector<16x128xf32>
    %19 = tpu.matmul %15, %18, %cst_11 {dimension_numbers = #tpu.dot_dimension_numbers<[1], [0], [0], [1], [0, 0, 1, 1], [], []>} : vector<16x256xf32>, vector<256x128xf32>, vector<16x128xf32> -> vector<16x128xf32>
    %20 = arith.addf %16, %19 : vector<16x128xf32>
    %c0_12 = arith.constant 0 : index
    %c0_13 = arith.constant 0 : index
    %21 = vector.load %arg7[%c0_12, %c0_13] : memref<16x128xf32, #tpu.memory_space<vmem>>, vector<16x128xf32>
    tpu.vector_store %arg7[%c0_12, %c0_13], %20 {strides = array<i32>} : memref<16x128xf32, #tpu.memory_space<vmem>>, vector<16x128xf32>,
    %c1_i32 = arith.constant 1 : i32
    %22 = arith.cmpi eq, %arg2, %c1_i32 : i32
    %23 = arith.extui %22 : i1 to i32
    %c0_i32_14 = arith.constant 0 : i32
    %24 = arith.cmpi ne, %23, %c0_i32_14 : i32
    scf.if %24 {
      %c0_15 = arith.constant 0 : index
      %c0_16 = arith.constant 0 : index
      %25 = vector.load %arg7[%c0_15, %c0_16] : memref<16x128xf32, #tpu.memory_space<vmem>>, vector<16x128xf32>
      %c0_17 = arith.constant 0 : index
      %c0_18 = arith.constant 0 : index
      %c0_19 = arith.constant 0 : index
      %26 = vector.load %arg6[%c0_17, %c0_18, %c0_19] : memref<1x16x128xf32, #tpu.memory_space<vmem>>, vector<1x16x128xf32>
      %27 = vector.shape_cast %26 : vector<1x16x128xf32> to vector<16x128xf32>
      %28 = vector.shape_cast %25 : vector<16x128xf32> to vector<1x16x128xf32>
      tpu.vector_store %arg6[%c0_17, %c0_18, %c0_19], %28 {strides = array<i32>} : memref<1x16x128xf32, #tpu.memory_space<vmem>>, vector<1x16x128xf32>,
    } else {
    }
    return
  }
  func.func @transform_0(%arg0: i32, %arg1: i32, %arg2: i32) -> (i32, i32) {
    %c0_i32 = arith.constant 0 : i32
    %c0_i32_0 = arith.constant 0 : i32
    return %arg1, %c0_i32 : i32, i32
  }
  func.func @transform_1(%arg0: i32, %arg1: i32, %arg2: i32) -> (i32, i32, i32) {
    %c2_i32 = arith.constant 2 : i32
    %0 = arith.muli %arg0, %c2_i32 : i32
    %1 = arith.addi %0, %arg2 : i32
    %c0_i32 = arith.constant 0 : i32
    %c0_i32_0 = arith.constant 0 : i32
    %c0_i32_1 = arith.constant 0 : i32
    return %1, %c0_i32, %c0_i32_0 : i32, i32, i32
  }
  func.func @transform_2(%arg0: i32, %arg1: i32, %arg2: i32) -> (i32, i32, i32) {
    %c2_i32 = arith.constant 2 : i32
    %0 = arith.muli %arg0, %c2_i32 : i32
    %1 = arith.addi %0, %arg2 : i32
    %c0_i32 = arith.constant 0 : i32
    %c0_i32_0 = arith.constant 0 : i32
    %c0_i32_1 = arith.constant 0 : i32
    return %1, %c0_i32, %c0_i32_0 : i32, i32, i32
  }
  func.func @transform_3(%arg0: i32, %arg1: i32, %arg2: i32) -> (i32, i32, i32) {
    %c0_i32 = arith.constant 0 : i32
    %c0_i32_0 = arith.constant 0 : i32
    return %arg0, %arg1, %c0_i32 : i32, i32, i32
  }
}

</mosaic_0001>

<llo_original>
// kernel: qwen2_mlp.1
$region0: #{qwen2_mlp.1}
  #allocation0 [shape = 'u32[]', space=smem, size = 0x4, offset = 0x4, fixed_abs, tag = 'smem constant byte address 0x4 - core index']
  #allocation1 [shape = 'u32[144,128]{1,0:T(1,128)}', space=vmem, size = 0x12000, scoped, tag = 'internal scratch']
  #allocation2 [shape = 'f32[16,128]{1,0:T(8,128)}', space=vmem, size = 0x2000, scoped, tag = 'scratch operand']
  %s0 = inlined_call_operand.hbm [shape: f32[16,128], index: 0, kind: input, shape index: {}]
  %s1 = inlined_call_operand.hbm [shape: f32[2,128,512], index: 1, kind: input, shape index: {}]
  %s2 = inlined_call_operand.hbm [shape: f32[2,256,128], index: 2, kind: input, shape index: {}]
  %s3 = inlined_call_operand.hbm [shape: f32[1,16,128], index: 3, kind: output, shape index: {}]
  %s4 = sld [smem:[#allocation0]]
  $region65: #{qwen2_mlp.1} parent=0
    _
  %s6 = ssub.s32 1, %s4
  %s7 = scalar_select 0, %s6, %s4
  $region1: #{qwen2_mlp.1} parent=0
    #allocation3 [shape = 'u8[8192]{0}', space=vmem, size = 0x2000, scoped, tag = 'input window, operand 0, single buffered']
    #allocation4 [shape = 's32[2]{0}', space=sflag, size = 0x8, scoped, tag = 'scoped memory for qwen2_mlp.1']
    #allocation5 [shape = 's32[2]{0}', space=sflag, size = 0x8, scoped, tag = 'scoped memory for qwen2_mlp.1']
    #allocation6 [shape = 'u8[524288]{0}', space=vmem, size = 0x80000, scoped, tag = 'input window, operand 1']
    #allocation7 [shape = 's32[2]{0}', space=sflag, size = 0x8, scoped, tag = 'scoped memory for qwen2_mlp.1']
    #allocation8 [shape = 'u8[262144]{0}', space=vmem, size = 0x40000, scoped, tag = 'input window, operand 2']
    #allocation9 [shape = 'u8[8192]{0}', space=vmem, size = 0x2000, scoped, tag = 'output window, operand 0, single buffered']
    %8 = vsyncpa [#allocation4], 0
    %9 = vsyncpa [#allocation7], 0
    %s10 = scalar_lea.sflag [#allocation7], 1
    %11 = vsyncpa %s10, 0
    %12 = vsyncpa [#allocation5], 0
    loop: start=0, step=1, limit=4
    $region2: #{qwen2_mlp.1} parent=1 // loop_pre_header
      _
    $region3: #{qwen2_mlp.1} parent=1 // loop_header
      %s14 = sphi 0, %s18
      %p15 = scmp.ge.s32.totalorder %s14, 4
      %s21 = sphi 0, %s40
      %s22 = sphi 0, %s36
      %s23 = sphi 0, %s32
      %s24 = sphi 0, %s21
      %s25 = sphi 0, %s22
      %s26 = sphi 0, %s23
      %s27 = sphi 0, %s24
      %s28 = sphi 0, %s25
      %s29 = sphi 0, %s26
      %s43 = sphi 0, %s45
      %s46 = sphi 0, %s43
      %s47 = sphi 0, %s46
      %s63 = sphi 0, %s47
      %s73 = sphi 0, %s75
      %s76 = sphi 0, %s73
      %s77 = sphi 0, %s76
      %s93 = sphi 0, %s77
      %s103 = sphi 0, %s105
      %s106 = sphi 0, %s103
      %s107 = sphi 0, %s106
      %s123 = sphi 0, %s107
      %s131 = sphi 0, %s133
      %s134 = sphi 0, %s131
      %s135 = sphi 0, %s134
      %s151 = sphi 0, %s135
    $region4: #{qwen2_mlp.1} parent=1 // loop_header_branch
      %17 = sbr.rel (%p15) target = $region8
    $region5: #{qwen2_mlp.1} parent=1 // loop_body
      %s19 = ssub.s32 %s14, 1
      %s20 = ssub.s32 %s14, 2
      %s30 = sadd.s32 1, %s23
      %p31 = scmp.ge.s32.totalorder %s30, 2
      %s32 = scalar_select %p31, 0, %s30
      %s33 = sadd.s32 1, %s22
      %s34 = scalar_select %p31, %s33, %s22
      %p35 = scmp.ge.s32.totalorder %s34, 1
      %s36 = scalar_select %p35, 0, %s34
      %s37 = sadd.s32 1, %s21
      %s38 = scalar_select %p35, %s37, %s21
      %p39 = scmp.ge.s32.totalorder %s38, 1
      %s40 = scalar_select %p39, 0, %s38
      %s41 = ssub.s32 %s22, %s36
      %p42 = scmp.eq.s32.totalorder %s41, 0
      %s44 = sadd.s32 %s43, 1
      %s45 = scalar_select %p42, %s43, %s44
      %p48 = pneg %p42
      %p49 = scmp.eq.s32.totalorder %s14, 1
      %p50 = por %p48, %p49
      %p51 = scmp.ne.s32.totalorder %s43, %s46
      %p52 = scmp.eq.s32.totalorder %s14, 0
      %p53 = por %p51, %p52
      %p54 = scmp.ne.s32.totalorder %s43, %s46
      %p55 = scmp.eq.s32.totalorder %s19, 1
      %p56 = por %p54, %p55
      %p57 = scmp.ne.s32.totalorder %s46, %s47
      %p58 = scmp.eq.s32.totalorder %s19, 0
      %p59 = por %p57, %p58
      %p60 = scmp.ne.s32.totalorder %s46, %s47
      %p61 = scmp.eq.s32.totalorder %s20, 1
      %p62 = por %p60, %p61
      %p64 = scmp.ne.s32.totalorder %s47, %s63
      %p65 = scmp.eq.s32.totalorder %s20, 0
      %p66 = por %p64, %p65
      %s67 = smul.u32 %s21, 2
      %s68 = sadd.s32 %s67, %s23
      %s69 = smul.u32 %s40, 2
      %s70 = sadd.s32 %s69, %s32
      %s71 = ssub.s32 %s68, %s70
      %p72 = scmp.eq.s32.totalorder %s71, 0
      %s74 = sadd.s32 %s73, 1
      %s75 = scalar_select %p72, %s73, %s74
      %p78 = pneg %p72
      %p79 = scmp.eq.s32.totalorder %s14, 1
      %p80 = por %p78, %p79
      %p81 = scmp.ne.s32.totalorder %s73, %s76
      %p82 = scmp.eq.s32.totalorder %s14, 0
      %p83 = por %p81, %p82
      %p84 = scmp.ne.s32.totalorder %s73, %s76
      %p85 = scmp.eq.s32.totalorder %s19, 1
      %p86 = por %p84, %p85
      %p87 = scmp.ne.s32.totalorder %s76, %s77
      %p88 = scmp.eq.s32.totalorder %s19, 0
      %p89 = por %p87, %p88
      %p90 = scmp.ne.s32.totalorder %s76, %s77
      %p91 = scmp.eq.s32.totalorder %s20, 1
      %p92 = por %p90, %p91
      %p94 = scmp.ne.s32.totalorder %s77, %s93
      %p95 = scmp.eq.s32.totalorder %s20, 0
      %p96 = por %p94, %p95
      %s97 = smul.u32 %s21, 2
      %s98 = sadd.s32 %s97, %s23
      %s99 = smul.u32 %s40, 2
      %s100 = sadd.s32 %s99, %s32
      %s101 = ssub.s32 %s98, %s100
      %p102 = scmp.eq.s32.totalorder %s101, 0
      %s104 = sadd.s32 %s103, 1
      %s105 = scalar_select %p102, %s103, %s104
      %p108 = pneg %p102
      %p109 = scmp.eq.s32.totalorder %s14, 1
      %p110 = por %p108, %p109
      %p111 = scmp.ne.s32.totalorder %s103, %s106
      %p112 = scmp.eq.s32.totalorder %s14, 0
      %p113 = por %p111, %p112
      %p114 = scmp.ne.s32.totalorder %s103, %s106
      %p115 = scmp.eq.s32.totalorder %s19, 1
      %p116 = por %p114, %p115
      %p117 = scmp.ne.s32.totalorder %s106, %s107
      %p118 = scmp.eq.s32.totalorder %s19, 0
      %p119 = por %p117, %p118
      %p120 = scmp.ne.s32.totalorder %s106, %s107
      %p121 = scmp.eq.s32.totalorder %s20, 1
      %p122 = por %p120, %p121
      %p124 = scmp.ne.s32.totalorder %s107, %s123
      %p125 = scmp.eq.s32.totalorder %s20, 0
      %p126 = por %p124, %p125
      %s127 = ssub.s32 %s21, %s40
      %s128 = ssub.s32 %s22, %s36
      %s129 = sor.u32 %s127, %s128
      %p130 = scmp.eq.s32.totalorder %s129, 0
      %s132 = sadd.s32 %s131, 1
      %s133 = scalar_select %p130, %s131, %s132
      %p136 = pneg %p130
      %p137 = scmp.eq.s32.totalorder %s14, 1
      %p138 = por %p136, %p137
      %p139 = scmp.ne.s32.totalorder %s131, %s134
      %p140 = scmp.eq.s32.totalorder %s14, 0
      %p141 = por %p139, %p140
      %p142 = scmp.ne.s32.totalorder %s131, %s134
      %p143 = scmp.eq.s32.totalorder %s19, 1
      %p144 = por %p142, %p143
      %p145 = scmp.ne.s32.totalorder %s134, %s135
      %p146 = scmp.eq.s32.totalorder %s19, 0
      %p147 = por %p145, %p146
      %p148 = scmp.ne.s32.totalorder %s134, %s135
      %p149 = scmp.eq.s32.totalorder %s20, 1
      %p150 = por %p148, %p149
      %p152 = scmp.ne.s32.totalorder %s135, %s151
      %p153 = scmp.eq.s32.totalorder %s20, 0
      %p154 = por %p152, %p153
      %p155 = scmp.le.s32.totalorder 1, %s14
      %p156 = scmp.lt.s32.totalorder %s14, 3
      %p157 = pnand %p155, %p156
      %p158 = pneg %p157
      // Predicated region
      $region9: #{qwen2_mlp.1} parent=5 // pred_check
        _
      $region10: #{qwen2_mlp.1} parent=5 // pred_check_branch
        %160 = sbr.rel (%p157) target = $region12
      $region11: #{qwen2_mlp.1} parent=5 // pred_region
        %s161 = ssub.s32 %s14, 1
        // Predicated region
        $region13: #{qwen2_mlp.1} parent=11 // pred_check
          %p162 = pneg %p59
        $region14: #{qwen2_mlp.1} parent=11 // pred_check_branch
          %164 = sbr.rel (%p162) target = $region16
        $region15: #{qwen2_mlp.1} parent=11 // pred_region
          %s165 = smul.u32 2, %s25
          %s167 = ssub.s32 256, 256
          %168 = vsyncadd [#allocation4], %s167
          %s169 = smul.addr %s165, 128
          %s170 = scalar_lea.hbm %s0, %s169
          %s171 = sshll.u32 [#allocation3], 4
          %s172 = int_to_ptr.vmem [resolvable:$true] %s171
          %177 = dma.hbm_to_vmem [thread:$0]  %s170, 256, %s172, [#allocation4], 128, 128, 8
        $region16: #{qwen2_mlp.1} parent=11 // pred_fallthru
          _
      $region12: #{qwen2_mlp.1} parent=5 // pred_fallthru
        _
      %p178 = scmp.lt.s32.totalorder %s14, 2
      // Predicated region
      $region17: #{qwen2_mlp.1} parent=5 // pred_check
        %p179 = pneg %p178
      $region18: #{qwen2_mlp.1} parent=5 // pred_check_branch
        %181 = sbr.rel (%p179) target = $region20
      $region19: #{qwen2_mlp.1} parent=5 // pred_region
        // Predicated region
        $region21: #{qwen2_mlp.1} parent=19 // pred_check
          %p182 = pneg %p83
        $region22: #{qwen2_mlp.1} parent=19 // pred_check_branch
          %184 = sbr.rel (%p182) target = $region24
        $region23: #{qwen2_mlp.1} parent=19 // pred_region
          %s185 = sand.u32 %s14, 1
          %s186 = scalar_lea.sflag [#allocation7], %s185
          %s187 = sand.u32 %s73, 1
          %s188 = smul.addr %s187, 512
          %s189 = scalar_lea.vmem [#allocation6], %s188
          %s190 = smul.u32 %s21, 2
          %s191 = sadd.s32 %s190, %s23
          %s193 = ssub.s32 8192, 8192
          %194 = vsyncadd %s186, %s193
          %s195 = smul.addr %s191, 64
          %s196 = smul.addr %s195, 128
          %s197 = scalar_lea.hbm %s1, %s196
          %s198 = sshll.u32 %s189, 4
          %s199 = int_to_ptr.vmem [resolvable:$true] %s198
          %204 = dma.hbm_to_vmem [thread:$0]  %s197, 8192, %s199, %s186, 512, 512, 32
        $region24: #{qwen2_mlp.1} parent=19 // pred_fallthru
          _
        // Predicated region
        $region25: #{qwen2_mlp.1} parent=19 // pred_check
          %p205 = pneg %p113
        $region26: #{qwen2_mlp.1} parent=19 // pred_check_branch
          %207 = sbr.rel (%p205) target = $region28
        $region27: #{qwen2_mlp.1} parent=19 // pred_region
          %s208 = sand.u32 %s14, 1
          %s209 = scalar_lea.sflag [#allocation7], %s208
          %s210 = sand.u32 %s103, 1
          %s211 = smul.addr %s210, 256
          %s212 = scalar_lea.vmem [#allocation8], %s211
          %s213 = smul.u32 %s21, 2
          %s214 = sadd.s32 %s213, %s23
          %s216 = ssub.s32 4096, 4096
          %217 = vsyncadd %s209, %s216
          %s218 = smul.addr %s214, 32
          %s219 = smul.addr %s218, 128
          %s220 = scalar_lea.hbm %s2, %s219
          %s221 = sshll.u32 %s212, 4
          %s222 = int_to_ptr.vmem [resolvable:$true] %s221
          %227 = dma.hbm_to_vmem [thread:$0]  %s220, 4096, %s222, %s209, 128, 128, 8
        $region28: #{qwen2_mlp.1} parent=19 // pred_fallthru
          _
      $region20: #{qwen2_mlp.1} parent=5 // pred_fallthru
        _
      %p228 = scmp.le.s32.totalorder 1, %s14
      %p229 = scmp.lt.s32.totalorder %s14, 3
      %p230 = pnand %p228, %p229
      %p231 = pneg %p230
      // Predicated region
      $region29: #{qwen2_mlp.1} parent=5 // pred_check
        _
      $region30: #{qwen2_mlp.1} parent=5 // pred_check_branch
        %233 = sbr.rel (%p230) target = $region32
      $region31: #{qwen2_mlp.1} parent=5 // pred_region
        %s234 = ssub.s32 %s14, 1
        // Predicated region
        $region33: #{qwen2_mlp.1} parent=31 // pred_check
          %p235 = pneg %p59
        $region34: #{qwen2_mlp.1} parent=31 // pred_check_branch
          %237 = sbr.rel (%p235) target = $region36
        $region35: #{qwen2_mlp.1} parent=31 // pred_region
          %238 = dma.done [#allocation4], 256
        $region36: #{qwen2_mlp.1} parent=31 // pred_fallthru
          _
        %s239 = sand.u32 %s19, 1
        %s240 = scalar_lea.sflag [#allocation7], %s239
        %s241 = sand.u32 %s76, 1
        %s242 = smul.addr %s241, 512
        %s243 = scalar_lea.vmem [#allocation6], %s242
        // Predicated region
        $region37: #{qwen2_mlp.1} parent=31 // pred_check
          %p244 = pneg %p89
        $region38: #{qwen2_mlp.1} parent=31 // pred_check_branch
          %246 = sbr.rel (%p244) target = $region40
        $region39: #{qwen2_mlp.1} parent=31 // pred_region
          %247 = dma.done %s240, 8192
        $region40: #{qwen2_mlp.1} parent=31 // pred_fallthru
          _
        %s248 = sand.u32 %s19, 1
        %s249 = scalar_lea.sflag [#allocation7], %s248
        %s250 = sand.u32 %s106, 1
        %s251 = smul.addr %s250, 256
        %s252 = scalar_lea.vmem [#allocation8], %s251
        // Predicated region
        $region41: #{qwen2_mlp.1} parent=31 // pred_check
          %p253 = pneg %p119
        $region42: #{qwen2_mlp.1} parent=31 // pred_check_branch
          %255 = sbr.rel (%p253) target = $region44
        $region43: #{qwen2_mlp.1} parent=31 // pred_region
          %256 = dma.done %s249, 4096
        $region44: #{qwen2_mlp.1} parent=31 // pred_fallthru
          _
        %p257 = pneg %p59
        %p258 = pneg %p56
        %s259 = sand.u32 %s19, 1
        %s260 = scalar_lea.sflag [#allocation7], %s259
        %s261 = sand.u32 %s76, 1
        %s262 = smul.addr %s261, 512
        %s263 = scalar_lea.vmem [#allocation6], %s262
        %p264 = pneg %p89
        %p265 = pneg %p86
        %s266 = sand.u32 %s19, 1
        %s267 = scalar_lea.sflag [#allocation7], %s266
        %s268 = sand.u32 %s106, 1
        %s269 = smul.addr %s268, 256
        %s270 = scalar_lea.vmem [#allocation8], %s269
        %p271 = pneg %p119
        %p272 = pneg %p116
        %p273 = pneg %p147
        %p274 = pneg %p144
        %s275 = smul.u32 2, %s25
        %s276 = smul.u32 %s24, 2
        %s277 = sadd.s32 %s276, %s26
        %s278 = smul.u32 %s24, 2
        %s279 = sadd.s32 %s278, %s26
        %s280 = smul.u32 2, %s25
        %p281 = scmp.eq.s32.totalorder %s26, 0
        // Predicated region
        $region45: #{qwen2_mlp.1} parent=31 // pred_check
          %p282 = pneg %p281
        $region46: #{qwen2_mlp.1} parent=31 // pred_check_branch
          %284 = sbr.rel (%p282) target = $region48
        $region47: #{qwen2_mlp.1} parent=31 // pred_region
          %285 = vst [vmem:[#allocation2] sm:$0xff] 0.0
          %286 = vst [vmem:[#allocation2 + $0x8] sm:$0xff] 0.0
        $region48: #{qwen2_mlp.1} parent=31 // pred_fallthru
          _
        %v287 = vld [vmem:[#allocation3] sm:$0xff]
        %v288 = vld [vmem:[#allocation3 + $0x8] sm:$0xff]
        %v289 = vld [vmem:[%s243] sm:$0xff]
        %v290 = vld [vmem:[%s243 + $0x8] sm:$0xff]
        %v291 = vld [vmem:[%s243 + $0x10] sm:$0xff]
        %v292 = vld [vmem:[%s243 + $0x18] sm:$0xff]
        %v293 = vld [vmem:[%s243 + $0x20] sm:$0xff]
        %v294 = vld [vmem:[%s243 + $0x28] sm:$0xff]
        %v295 = vld [vmem:[%s243 + $0x30] sm:$0xff]
        %v296 = vld [vmem:[%s243 + $0x38] sm:$0xff]
        %v297 = vld [vmem:[%s243 + $0x40] sm:$0xff]
        %v298 = vld [vmem:[%s243 + $0x48] sm:$0xff]
        %v299 = vld [vmem:[%s243 + $0x50] sm:$0xff]
        %v300 = vld [vmem:[%s243 + $0x58] sm:$0xff]
        %v301 = vld [vmem:[%s243 + $0x60] sm:$0xff]
        %v302 = vld [vmem:[%s243 + $0x68] sm:$0xff]
        %v303 = vld [vmem:[%s243 + $0x70] sm:$0xff]
        %v304 = vld [vmem:[%s243 + $0x78] sm:$0xff]
        %v305 = vld [vmem:[%s243 + $0x80] sm:$0xff]
        %v306 = vld [vmem:[%s243 + $0x88] sm:$0xff]
        %v307 = vld [vmem:[%s243 + $0x90] sm:$0xff]
        %v308 = vld [vmem:[%s243 + $0x98] sm:$0xff]
        %v309 = vld [vmem:[%s243 + $0xa0] sm:$0xff]
        %v310 = vld [vmem:[%s243 + $0xa8] sm:$0xff]
        %v311 = vld [vmem:[%s243 + $0xb0] sm:$0xff]
        %v312 = vld [vmem:[%s243 + $0xb8] sm:$0xff]
        %v313 = vld [vmem:[%s243 + $0xc0] sm:$0xff]
        %v314 = vld [vmem:[%s243 + $0xc8] sm:$0xff]
        %v315 = vld [vmem:[%s243 + $0xd0] sm:$0xff]
        %v316 = vld [vmem:[%s243 + $0xd8] sm:$0xff]
        %v317 = vld [vmem:[%s243 + $0xe0] sm:$0xff]
        %v318 = vld [vmem:[%s243 + $0xe8] sm:$0xff]
        %v319 = vld [vmem:[%s243 + $0xf0] sm:$0xff]
        %v320 = vld [vmem:[%s243 + $0xf8] sm:$0xff]
        %v321 = vld [vmem:[%s243 + $0x100] sm:$0xff]
        %v322 = vld [vmem:[%s243 + $0x108] sm:$0xff]
        %v323 = vld [vmem:[%s243 + $0x110] sm:$0xff]
        %v324 = vld [vmem:[%s243 + $0x118] sm:$0xff]
        %v325 = vld [vmem:[%s243 + $0x120] sm:$0xff]
        %v326 = vld [vmem:[%s243 + $0x128] sm:$0xff]
        %v327 = vld [vmem:[%s243 + $0x130] sm:$0xff]
        %v328 = vld [vmem:[%s243 + $0x138] sm:$0xff]
        %v329 = vld [vmem:[%s243 + $0x140] sm:$0xff]
        %v330 = vld [vmem:[%s243 + $0x148] sm:$0xff]
        %v331 = vld [vmem:[%s243 + $0x150] sm:$0xff]
        %v332 = vld [vmem:[%s243 + $0x158] sm:$0xff]
        %v333 = vld [vmem:[%s243 + $0x160] sm:$0xff]
        %v334 = vld [vmem:[%s243 + $0x168] sm:$0xff]
        %v335 = vld [vmem:[%s243 + $0x170] sm:$0xff]
        %v336 = vld [vmem:[%s243 + $0x178] sm:$0xff]
        %v337 = vld [vmem:[%s243 + $0x180] sm:$0xff]
        %v338 = vld [vmem:[%s243 + $0x188] sm:$0xff]
        %v339 = vld [vmem:[%s243 + $0x190] sm:$0xff]
        %v340 = vld [vmem:[%s243 + $0x198] sm:$0xff]
        %v341 = vld [vmem:[%s243 + $0x1a0] sm:$0xff]
        %v342 = vld [vmem:[%s243 + $0x1a8] sm:$0xff]
        %v343 = vld [vmem:[%s243 + $0x1b0] sm:$0xff]
        %v344 = vld [vmem:[%s243 + $0x1b8] sm:$0xff]
        %v345 = vld [vmem:[%s243 + $0x1c0] sm:$0xff]
        %v346 = vld [vmem:[%s243 + $0x1c8] sm:$0xff]
        %v347 = vld [vmem:[%s243 + $0x1d0] sm:$0xff]
        %v348 = vld [vmem:[%s243 + $0x1d8] sm:$0xff]
        %v349 = vld [vmem:[%s243 + $0x1e0] sm:$0xff]
        %v350 = vld [vmem:[%s243 + $0x1e8] sm:$0xff]
        %v351 = vld [vmem:[%s243 + $0x1f0] sm:$0xff]
        %v352 = vld [vmem:[%s243 + $0x1f8] sm:$0xff]
        %353 = vmatprep.subr.mxu0 %v290
        %354 = vmatpush1.msra.mxu0 %v289
        %355 = vmatprep.subr.mxu0 %v294
        %356 = vmatpush1.msra.mxu0 %v293
        %357 = vmatprep.subr.mxu0 %v298
        %358 = vmatpush1.msra.mxu0 %v297
        %359 = vmatprep.subr.mxu0 %v302
        %360 = vmatpush1.msra.mxu0 %v301
        %361 = vmatprep.subr.mxu0 %v306
        %362 = vmatpush1.msra.mxu0 %v305
        %363 = vmatprep.subr.mxu0 %v310
        %364 = vmatpush1.msra.mxu0 %v309
        %365 = vmatprep.subr.mxu0 %v314
        %366 = vmatpush1.msra.mxu0 %v313
        %367 = vmatprep.subr.mxu0 %v318
        %368 = vmatpush1.msra.mxu0 %v317
        %369 = vmatprep.subr.mxu0 %v322
        %370 = vmatpush1.msra.mxu0 %v321
        %371 = vmatprep.subr.mxu0 %v326
        %372 = vmatpush1.msra.mxu0 %v325
        %373 = vmatprep.subr.mxu0 %v330
        %374 = vmatpush1.msra.mxu0 %v329
        %375 = vmatprep.subr.mxu0 %v334
        %376 = vmatpush1.msra.mxu0 %v333
        %377 = vmatprep.subr.mxu0 %v338
        %378 = vmatpush1.msra.mxu0 %v337
        %379 = vmatprep.subr.mxu0 %v342
        %380 = vmatpush1.msra.mxu0 %v341
        %381 = vmatprep.subr.mxu0 %v346
        %382 = vmatpush1.msra.mxu0 %v345
        %383 = vmatprep.subr.mxu0 %v350
        %384 = vmatpush1.msra.mxu0 %v349
        %385 = vmatprep.subr.mxu0 0.0
        %386 = vmatpush1.msra.mxu0 0.0
        %387 = vmatprep.subr.mxu0 0.0
        %388 = vmatpush1.msra.mxu0 0.0
        %389 = vmatprep.subr.mxu0 0.0
        %390 = vmatpush1.msra.mxu0 0.0
        %391 = vmatprep.subr.mxu0 0.0
        %392 = vmatpush1.msra.mxu0 0.0
        %393 = vmatprep.subr.mxu0 0.0
        %394 = vmatpush1.msra.mxu0 0.0
        %395 = vmatprep.subr.mxu0 0.0
        %396 = vmatpush1.msra.mxu0 0.0
        %397 = vmatprep.subr.mxu0 0.0
        %398 = vmatpush1.msra.mxu0 0.0
        %399 = vmatprep.subr.mxu0 0.0
        %400 = vmatpush1.msra.mxu0 0.0
        %401 = vmatprep.subr.mxu0 0.0
        %402 = vmatpush1.msra.mxu0 0.0
        %403 = vmatprep.subr.mxu0 0.0
        %404 = vmatpush1.msra.mxu0 0.0
        %405 = vmatprep.subr.mxu0 0.0
        %406 = vmatpush1.msra.mxu0 0.0
        %407 = vmatprep.subr.mxu0 0.0
        %408 = vmatpush1.msra.mxu0 0.0
        %409 = vmatprep.subr.mxu0 0.0
        %410 = vmatpush1.msra.mxu0 0.0
        %411 = vmatprep.subr.mxu0 0.0
        %412 = vmatpush1.msra.mxu0 0.0
        %413 = vmatprep.subr.mxu0 0.0
        %414 = vmatpush1.msra.mxu0 0.0
        %415 = vmatprep.subr.mxu0 0.0
        %416 = vmatpush1.msra.mxu0 0.0
        %417 = vmatprep.mubr.f32.mxu0 0.0
        %418 = vmatmul.mubr.f32.gmra.mrb[0].mxu0 %v287
        %v419 = vpop.f32.mrb[0].mxu0
        %v420 = vadd.f32 0.0, %v419
        %v421 = vpop.f32.mrb[0].mxu0
        %v422 = vadd.f32 0.0, %v421
        %423 = vmatprep.mubr.f32.mxu0 0.0
        %424 = vmatmul.mubr.f32.gmra.mrb[0].mxu0 %v288
        %v425 = vpop.f32.mrb[0].mxu0
        %v426 = vadd.f32 0.0, %v425
        %v427 = vpop.f32.mrb[0].mxu0
        %v428 = vadd.f32 0.0, %v427
        %429 = vdwg.mxu0
        %430 = vmatprep.subr.mxu0 %v292
        %431 = vmatpush1.msra.mxu0 %v291
        %432 = vmatprep.subr.mxu0 %v296
        %433 = vmatpush1.msra.mxu0 %v295
        %434 = vmatprep.subr.mxu0 %v300
        %435 = vmatpush1.msra.mxu0 %v299
        %436 = vmatprep.subr.mxu0 %v304
        %437 = vmatpush1.msra.mxu0 %v303
        %438 = vmatprep.subr.mxu0 %v308
        %439 = vmatpush1.msra.mxu0 %v307
        %440 = vmatprep.subr.mxu0 %v312
        %441 = vmatpush1.msra.mxu0 %v311
        %442 = vmatprep.subr.mxu0 %v316
        %443 = vmatpush1.msra.mxu0 %v315
        %444 = vmatprep.subr.mxu0 %v320
        %445 = vmatpush1.msra.mxu0 %v319
        %446 = vmatprep.subr.mxu0 %v324
        %447 = vmatpush1.msra.mxu0 %v323
        %448 = vmatprep.subr.mxu0 %v328
        %449 = vmatpush1.msra.mxu0 %v327
        %450 = vmatprep.subr.mxu0 %v332
        %451 = vmatpush1.msra.mxu0 %v331
        %452 = vmatprep.subr.mxu0 %v336
        %453 = vmatpush1.msra.mxu0 %v335
        %454 = vmatprep.subr.mxu0 %v340
        %455 = vmatpush1.msra.mxu0 %v339
        %456 = vmatprep.subr.mxu0 %v344
        %457 = vmatpush1.msra.mxu0 %v343
        %458 = vmatprep.subr.mxu0 %v348
        %459 = vmatpush1.msra.mxu0 %v347
        %460 = vmatprep.subr.mxu0 %v352
        %461 = vmatpush1.msra.mxu0 %v351
        %462 = vmatprep.subr.mxu0 0.0
        %463 = vmatpush1.msra.mxu0 0.0
        %464 = vmatprep.subr.mxu0 0.0
        %465 = vmatpush1.msra.mxu0 0.0
        %466 = vmatprep.subr.mxu0 0.0
        %467 = vmatpush1.msra.mxu0 0.0
        %468 = vmatprep.subr.mxu0 0.0
        %469 = vmatpush1.msra.mxu0 0.0
        %470 = vmatprep.subr.mxu0 0.0
        %471 = vmatpush1.msra.mxu0 0.0
        %472 = vmatprep.subr.mxu0 0.0
        %473 = vmatpush1.msra.mxu0 0.0
        %474 = vmatprep.subr.mxu0 0.0
        %475 = vmatpush1.msra.mxu0 0.0
        %476 = vmatprep.subr.mxu0 0.0
        %477 = vmatpush1.msra.mxu0 0.0
        %478 = vmatprep.subr.mxu0 0.0
        %479 = vmatpush1.msra.mxu0 0.0
        %480 = vmatprep.subr.mxu0 0.0
        %481 = vmatpush1.msra.mxu0 0.0
        %482 = vmatprep.subr.mxu0 0.0
        %483 = vmatpush1.msra.mxu0 0.0
        %484 = vmatprep.subr.mxu0 0.0
        %485 = vmatpush1.msra.mxu0 0.0
        %486 = vmatprep.subr.mxu0 0.0
        %487 = vmatpush1.msra.mxu0 0.0
        %488 = vmatprep.subr.mxu0 0.0
        %489 = vmatpush1.msra.mxu0 0.0
        %490 = vmatprep.subr.mxu0 0.0
        %491 = vmatpush1.msra.mxu0 0.0
        %492 = vmatprep.subr.mxu0 0.0
        %493 = vmatpush1.msra.mxu0 0.0
        %494 = vmatprep.mubr.f32.mxu0 0.0
        %495 = vmatmul.mubr.f32.gmra.mrb[0].mxu0 %v287
        %v496 = vpop.f32.mrb[0].mxu0
        %v497 = vadd.f32 0.0, %v496
        %v498 = vpop.f32.mrb[0].mxu0
        %v499 = vadd.f32 0.0, %v498
        %500 = vmatprep.mubr.f32.mxu0 0.0
        %501 = vmatmul.mubr.f32.gmra.mrb[0].mxu0 %v288
        %v502 = vpop.f32.mrb[0].mxu0
        %v503 = vadd.f32 0.0, %v502
        %v504 = vpop.f32.mrb[0].mxu0
        %v505 = vadd.f32 0.0, %v504
        %506 = vdwg.mxu0
        %v507 = vxor.u32 %v420, 2147483648
        %v508 = vxor.u32 %v422, 2147483648
        %v509 = vxor.u32 %v426, 2147483648
        %v510 = vxor.u32 %v428, 2147483648
        %v511 = vmul.f32 %v507, 1.442695
        %v512 = vpow.pop %v511
        %v513 = vmul.f32 %v508, 1.442695
        %v514 = vpow.pop %v513
        %v515 = vmul.f32 %v509, 1.442695
        %v516 = vpow.pop %v515
        %v517 = vmul.f32 %v510, 1.442695
        %v518 = vpow.pop %v517
        %v519 = vadd.f32 %v512, 1.0
        %v520 = vadd.f32 %v514, 1.0
        %v521 = vadd.f32 %v516, 1.0
        %v522 = vadd.f32 %v518, 1.0
        %v523 = vrcp.pop %v519
        %v524 = vmul.f32 1.0, %v523
        %v525 = vrcp.pop %v520
        %v526 = vmul.f32 1.0, %v525
        %v527 = vrcp.pop %v521
        %v528 = vmul.f32 1.0, %v527
        %v529 = vrcp.pop %v522
        %v530 = vmul.f32 1.0, %v529
        %v531 = vmul.f32 %v420, %v524
        %v532 = vmul.f32 %v422, %v526
        %v533 = vmul.f32 %v426, %v528
        %v534 = vmul.f32 %v428, %v530
        %v535 = vmul.f32 %v531, %v497
        %v536 = vmul.f32 %v532, %v499
        %v537 = vmul.f32 %v533, %v503
        %v538 = vmul.f32 %v534, %v505
        %v539 = vld [vmem:[#allocation2] sm:$0xff]
        %v540 = vld [vmem:[#allocation2 + $0x8] sm:$0xff]
        %v541 = vld [vmem:[%s252] sm:$0xff]
        %v542 = vld [vmem:[%s252 + $0x8] sm:$0xff]
        %v543 = vld [vmem:[%s252 + $0x10] sm:$0xff]
        %v544 = vld [vmem:[%s252 + $0x18] sm:$0xff]
        %v545 = vld [vmem:[%s252 + $0x20] sm:$0xff]
        %v546 = vld [vmem:[%s252 + $0x28] sm:$0xff]
        %v547 = vld [vmem:[%s252 + $0x30] sm:$0xff]
        %v548 = vld [vmem:[%s252 + $0x38] sm:$0xff]
        %v549 = vld [vmem:[%s252 + $0x40] sm:$0xff]
        %v550 = vld [vmem:[%s252 + $0x48] sm:$0xff]
        %v551 = vld [vmem:[%s252 + $0x50] sm:$0xff]
        %v552 = vld [vmem:[%s252 + $0x58] sm:$0xff]
        %v553 = vld [vmem:[%s252 + $0x60] sm:$0xff]
        %v554 = vld [vmem:[%s252 + $0x68] sm:$0xff]
        %v555 = vld [vmem:[%s252 + $0x70] sm:$0xff]
        %v556 = vld [vmem:[%s252 + $0x78] sm:$0xff]
        %v557 = vld [vmem:[%s252 + $0x80] sm:$0xff]
        %v558 = vld [vmem:[%s252 + $0x88] sm:$0xff]
        %v559 = vld [vmem:[%s252 + $0x90] sm:$0xff]
        %v560 = vld [vmem:[%s252 + $0x98] sm:$0xff]
        %v561 = vld [vmem:[%s252 + $0xa0] sm:$0xff]
        %v562 = vld [vmem:[%s252 + $0xa8] sm:$0xff]
        %v563 = vld [vmem:[%s252 + $0xb0] sm:$0xff]
        %v564 = vld [vmem:[%s252 + $0xb8] sm:$0xff]
        %v565 = vld [vmem:[%s252 + $0xc0] sm:$0xff]
        %v566 = vld [vmem:[%s252 + $0xc8] sm:$0xff]
        %v567 = vld [vmem:[%s252 + $0xd0] sm:$0xff]
        %v568 = vld [vmem:[%s252 + $0xd8] sm:$0xff]
        %v569 = vld [vmem:[%s252 + $0xe0] sm:$0xff]
        %v570 = vld [vmem:[%s252 + $0xe8] sm:$0xff]
        %v571 = vld [vmem:[%s252 + $0xf0] sm:$0xff]
        %v572 = vld [vmem:[%s252 + $0xf8] sm:$0xff]
        %573 = vmatprep.subr.mxu0 0.0
        %574 = vmatpush1.msra.mxu0 %v541
        %575 = vmatprep.subr.mxu0 0.0
        %576 = vmatpush1.msra.mxu0 %v542
        %577 = vmatprep.subr.mxu0 0.0
        %578 = vmatpush1.msra.mxu0 %v543
        %579 = vmatprep.subr.mxu0 0.0
        %580 = vmatpush1.msra.mxu0 %v544
        %581 = vmatprep.subr.mxu0 0.0
        %582 = vmatpush1.msra.mxu0 %v545
        %583 = vmatprep.subr.mxu0 0.0
        %584 = vmatpush1.msra.mxu0 %v546
        %585 = vmatprep.subr.mxu0 0.0
        %586 = vmatpush1.msra.mxu0 %v547
        %587 = vmatprep.subr.mxu0 0.0
        %588 = vmatpush1.msra.mxu0 %v548
        %589 = vmatprep.subr.mxu0 0.0
        %590 = vmatpush1.msra.mxu0 %v549
        %591 = vmatprep.subr.mxu0 0.0
        %592 = vmatpush1.msra.mxu0 %v550
        %593 = vmatprep.subr.mxu0 0.0
        %594 = vmatpush1.msra.mxu0 %v551
        %595 = vmatprep.subr.mxu0 0.0
        %596 = vmatpush1.msra.mxu0 %v552
        %597 = vmatprep.subr.mxu0 0.0
        %598 = vmatpush1.msra.mxu0 %v553
        %599 = vmatprep.subr.mxu0 0.0
        %600 = vmatpush1.msra.mxu0 %v554
        %601 = vmatprep.subr.mxu0 0.0
        %602 = vmatpush1.msra.mxu0 %v555
        %603 = vmatprep.subr.mxu0 0.0
        %604 = vmatpush1.msra.mxu0 %v556
        %605 = vmatprep.subr.mxu0 0.0
        %606 = vmatpush1.msra.mxu0 %v557
        %607 = vmatprep.subr.mxu0 0.0
        %608 = vmatpush1.msra.mxu0 %v558
        %609 = vmatprep.subr.mxu0 0.0
        %610 = vmatpush1.msra.mxu0 %v559
        %611 = vmatprep.subr.mxu0 0.0
        %612 = vmatpush1.msra.mxu0 %v560
        %613 = vmatprep.subr.mxu0 0.0
        %614 = vmatpush1.msra.mxu0 %v561
        %615 = vmatprep.subr.mxu0 0.0
        %616 = vmatpush1.msra.mxu0 %v562
        %617 = vmatprep.subr.mxu0 0.0
        %618 = vmatpush1.msra.mxu0 %v563
        %619 = vmatprep.subr.mxu0 0.0
        %620 = vmatpush1.msra.mxu0 %v564
        %621 = vmatprep.subr.mxu0 0.0
        %622 = vmatpush1.msra.mxu0 %v565
        %623 = vmatprep.subr.mxu0 0.0
        %624 = vmatpush1.msra.mxu0 %v566
        %625 = vmatprep.subr.mxu0 0.0
        %626 = vmatpush1.msra.mxu0 %v567
        %627 = vmatprep.subr.mxu0 0.0
        %628 = vmatpush1.msra.mxu0 %v568
        %629 = vmatprep.subr.mxu0 0.0
        %630 = vmatpush1.msra.mxu0 %v569
        %631 = vmatprep.subr.mxu0 0.0
        %632 = vmatpush1.msra.mxu0 %v570
        %633 = vmatprep.subr.mxu0 0.0
        %634 = vmatpush1.msra.mxu0 %v571
        %635 = vmatprep.subr.mxu0 0.0
        %636 = vmatpush1.msra.mxu0 %v572
        %637 = vmatprep.mubr.f32.mxu0 %v536
        %638 = vmatmul.mubr.f32.gmra.mrb[0].mxu0 %v535
        %v639 = vpop.f32.mrb[0].mxu0
        %v640 = vadd.f32 0.0, %v639
        %v641 = vpop.f32.mrb[0].mxu0
        %642 = vmatprep.mubr.f32.mxu0 %v538
        %643 = vmatmul.mubr.f32.gmra.mrb[0].mxu0 %v537
        %v644 = vpop.f32.mrb[0].mxu0
        %v645 = vadd.f32 0.0, %v644
        %v646 = vpop.f32.mrb[0].mxu0
        %647 = vdwg.mxu0
        %v648 = vadd.f32 %v539, %v640
        %v649 = vadd.f32 %v540, %v645
        %650 = vst [vmem:[#allocation2] sm:$0xff] %v648
        %651 = vst [vmem:[#allocation2 + $0x8] sm:$0xff] %v649
        %p652 = scmp.eq.s32.totalorder %s26, 1
        // Predicated region
        $region49: #{qwen2_mlp.1} parent=31 // pred_check
          %p653 = pneg %p652
        $region50: #{qwen2_mlp.1} parent=31 // pred_check_branch
          %655 = sbr.rel (%p653) target = $region52
        $region51: #{qwen2_mlp.1} parent=31 // pred_region
          %v656 = vld [vmem:[#allocation2] sm:$0xff]
          %v657 = vld [vmem:[#allocation2 + $0x8] sm:$0xff]
          %658 = vst [vmem:[#allocation9] sm:$0xff] %v656
          %659 = vst [vmem:[#allocation9 + $0x8] sm:$0xff] %v657
        $region52: #{qwen2_mlp.1} parent=31 // pred_fallthru
          _
        // Predicated region
        $region53: #{qwen2_mlp.1} parent=31 // pred_check
          %p660 = pneg %p144
        $region54: #{qwen2_mlp.1} parent=31 // pred_check_branch
          %662 = sbr.rel (%p660) target = $region56
        $region55: #{qwen2_mlp.1} parent=31 // pred_region
          %s663 = smul.u32 2, %s25
          %s665 = ssub.s32 256, 256
          %666 = vsyncadd [#allocation5], %s665
          %s667 = smul.addr %s24, 2
          %s668 = sadd.s32 %s663, %s667
          %s669 = smul.addr %s668, 128
          %s670 = scalar_lea.hbm %s3, %s669
          %s671 = sshll.u32 [#allocation9], 4
          %s672 = int_to_ptr.vmem [resolvable:$true] %s671
          %677 = dma.vmem_to_hbm [thread:$0]  %s672, 256, %s670, [#allocation5], 128, 128, 8
        $region56: #{qwen2_mlp.1} parent=31 // pred_fallthru
          _
        // Predicated region
        $region57: #{qwen2_mlp.1} parent=31 // pred_check
          %p678 = pneg %p144
        $region58: #{qwen2_mlp.1} parent=31 // pred_check_branch
          %680 = sbr.rel (%p678) target = $region60
        $region59: #{qwen2_mlp.1} parent=31 // pred_region
          %681 = dma.done [#allocation5], 256
        $region60: #{qwen2_mlp.1} parent=31 // pred_fallthru
          _
      $region32: #{qwen2_mlp.1} parent=5 // pred_fallthru
        _
      %p682 = scmp.le.s32.totalorder 2, %s14
      // Predicated region
      $region61: #{qwen2_mlp.1} parent=5 // pred_check
        %p683 = pneg %p682
      $region62: #{qwen2_mlp.1} parent=5 // pred_check_branch
        %685 = sbr.rel (%p683) target = $region64
      $region63: #{qwen2_mlp.1} parent=5 // pred_region
        %s686 = ssub.s32 %s14, 2
      $region64: #{qwen2_mlp.1} parent=5 // pred_fallthru
        _
    $region6: #{qwen2_mlp.1} parent=1 // loop_footer
      %s18 = sadd.s32 1, %s14
    $region7: #{qwen2_mlp.1} parent=1 // loop_footer_branch
      %13 = sbr.rel target = $region3
    $region8: #{qwen2_mlp.1} parent=1 // loop_exit
      _
    %687 = vsyncpa [#allocation4], 1
    %s688 = scalar_lea.sflag [#allocation4], 1
    %689 = vsyncpa %s688, 1
    %690 = vsyncpa [#allocation7], 1
    %s691 = scalar_lea.sflag [#allocation7], 1
    %692 = vsyncpa %s691, 1
    %693 = vsyncpa [#allocation5], 1
    %s694 = scalar_lea.sflag [#allocation5], 1
    %695 = vsyncpa %s694, 1

</llo_original>
